<compile_context>
chip_gen: v7x
topology: tpu7x:2x2x1
jax: 0.10.0
libtpu: 0.0.40
codegen_flags: <defaults>
</compile_context>

<pallas_src>
import numpy as np
import jax
import jax.numpy as jnp
from jax.experimental import pallas as pl
from jax.experimental.pallas import tpu as pltpu


# ----------------------------------------------------------------------------
# Kernels: pure block copies into static slices of the output block
# ----------------------------------------------------------------------------
def _make_copy_kernel_2d(lane_offsets, widths):
    """Inputs viewed as (outer, C_i*inner); lane-dense stores at 128-aligned offsets."""
    def kernel(*refs):
        *in_refs, o_ref = refs
        for r, off, w in zip(in_refs, lane_offsets, widths):
            o_ref[:, off:off + w] = r[...].astype(o_ref.dtype)
    return kernel


def _make_copy_kernel_3d(chan_offsets, chans):
    """Inputs viewed as (outer, C_i, inner); channel-sliced stores."""
    def kernel(*refs):
        *in_refs, o_ref = refs
        for r, off, c in zip(in_refs, chan_offsets, chans):
            o_ref[:, off:off + c, :] = r[...].astype(o_ref.dtype)
    return kernel


# ----------------------------------------------------------------------------
# Wrapper: torch.cat(x, dim) for a list of same-rank arrays
# ----------------------------------------------------------------------------
def concat_pallas(xs, dimension=1):
    xs = [jnp.asarray(x) for x in xs]
    ndim = xs[0].ndim
    d = dimension % ndim

    out_dtype = xs[0].dtype
    for x in xs[1:]:
        out_dtype = jnp.promote_types(out_dtype, x.dtype)

    shape0 = xs[0].shape
    for x in xs:
        assert x.ndim == ndim
        assert tuple(x.shape[:d]) == tuple(shape0[:d])
        assert tuple(x.shape[d + 1:]) == tuple(shape0[d + 1:])

    outer = int(np.prod(shape0[:d], dtype=np.int64)) if d > 0 else 1
    inner = int(np.prod(shape0[d + 1:], dtype=np.int64)) if d + 1 < ndim else 1
    cs = [int(x.shape[d]) for x in xs]
    c_total = sum(cs)
    offsets = [int(o) for o in np.cumsum([0] + cs[:-1])]       # start channel per input
    out_shape_nd = tuple(shape0[:d]) + (c_total,) + tuple(shape0[d + 1:])

    itemsize = jnp.dtype(out_dtype).itemsize
    in_bytes = sum(int(np.prod(x.shape, dtype=np.int64)) * jnp.dtype(x.dtype).itemsize
                   for x in xs)
    out_bytes = outer * c_total * inner * itemsize
    cost = pl.CostEstimate(flops=0, transcendentals=0,
                           bytes_accessed=int(in_bytes + out_bytes))
    cparams = dict(vmem_limit_bytes=32 << 20)

    # Block-size targets (bytes of output payload per grid step).
    target_bytes = 2 << 20
    max_block_bytes = 4 << 20

    # ---- Fast path: lane-dense fused (outer, C_i*inner) layout -------------
    widths = [c * inner for c in cs]
    w_total = c_total * inner
    row_bytes = w_total * itemsize
    fused_ok = (all((off * inner) % 128 == 0 for off in offsets)
                and row_bytes <= max_block_bytes)

    if fused_ok:
        b_outer = max(1, min(outer, target_bytes // max(1, row_bytes)))
        if b_outer < outer:
            # Second-to-last block dim must be a multiple of 8 (or full extent).
            b_outer = max(8, (b_outer // 8) * 8)
            if b_outer * row_bytes > max_block_bytes:
                fused_ok = False
        else:
            b_outer = outer
            # Prefer >=2 grid steps on large problems (megacore + pipelining).
            if outer >= 16 and outer * row_bytes >= 2 * target_bytes:
                half = ((outer // 2) // 8) * 8
                if half >= 8:
                    b_outer = half

    if fused_ok:
        xs2d = [x.reshape(outer, w) for x, w in zip(xs, widths)]        # free views
        lane_offsets = [off * inner for off in offsets]
        kernel = _make_copy_kernel_2d(lane_offsets, widths)
        grid = (pl.cdiv(outer, b_outer),)
        in_specs = [pl.BlockSpec((b_outer, w), lambda n: (n, 0)) for w in widths]
        out_specs = pl.BlockSpec((b_outer, w_total), lambda n: (n, 0))
        out2d = pl.pallas_call(
            kernel,
            out_shape=jax.ShapeDtypeStruct((outer, w_total), out_dtype),
            grid=grid,
            in_specs=in_specs,
            out_specs=out_specs,
            compiler_params=pltpu.CompilerParams(
                dimension_semantics=("parallel",), **cparams),
            cost_estimate=cost,
        )(*xs2d)
        return out2d.reshape(out_shape_nd)

    # ---- Generic fallback: (outer, C_i, inner), 2-D grid over outer/inner --
    row1_bytes = c_total * itemsize
    if inner <= 128 or inner * row1_bytes <= max_block_bytes:
        b_inner = inner
    else:
        b_inner = max(128, ((max_block_bytes // row1_bytes) // 128) * 128)
        b_inner = min(b_inner, inner)

    step_row_bytes = c_total * b_inner * itemsize
    b_outer = max(1, min(outer, target_bytes // max(1, step_row_bytes)))
    while b_outer > 1 and b_outer * step_row_bytes > max_block_bytes:
        b_outer //= 2

    xs3d = [x.reshape(outer, c, inner) for x, c in zip(xs, cs)]          # free views
    kernel = _make_copy_kernel_3d(offsets, cs)
    grid = (pl.cdiv(outer, b_outer), pl.cdiv(inner, b_inner))
    in_specs = [pl.BlockSpec((b_outer, c, b_inner), lambda n, m: (n, 0, m)) for c in cs]
    out_specs = pl.BlockSpec((b_outer, c_total, b_inner), lambda n, m: (n, 0, m))
    out3d = pl.pallas_call(
        kernel,
        out_shape=jax.ShapeDtypeStruct((outer, c_total, inner), out_dtype),
        grid=grid,
        in_specs=in_specs,
        out_specs=out_specs,
        compiler_params=pltpu.CompilerParams(
            dimension_semantics=("parallel", "parallel"), **cparams),
        cost_estimate=cost,
    )(*xs3d)
    return out3d.reshape(out_shape_nd)


if __name__ == "__main__":
    key = jax.random.PRNGKey(0)
    k1, k2, k3 = jax.random.split(key, 3)
    x1 = jax.random.normal(k1, (2, 4, 16, 16), jnp.float32)
    x2 = jax.random.normal(k2, (2, 4, 16, 16), jnp.float32)
    x3 = jax.random.normal(k3, (2, 8, 16, 16), jnp.float32)

    # Primary case: channel concat (dim=1), as used throughout models/common.py.
    out = jax.block_until_ready(concat_pallas([x1, x2, x3], dimension=1))
    ref = jnp.concatenate([x1, x2, x3], axis=1)
    assert out.shape == (2, 16, 16, 16) and out.dtype == ref.dtype
    assert np.array_equal(np.asarray(out), np.asarray(ref)), \
        "Pallas concat (dim=1) mismatch vs jnp.concatenate"

    # Secondary case: concat along a spatial dim (inner < 128 -> fused lane path).
    out2 = jax.block_until_ready(concat_pallas([x1, x2], dimension=2))
    ref2 = jnp.concatenate([x1, x2], axis=2)
    assert out2.shape == (2, 4, 32, 16)
    assert np.array_equal(np.asarray(out2), np.asarray(ref2)), \
        "Pallas concat (dim=2) mismatch vs jnp.concatenate"

    # Mixed dtype: promotion happens inside the kernel (no wrapper convert pass).
    x4 = x2.astype(jnp.bfloat16)
    out3 = jax.block_until_ready(concat_pallas([x1, x4], dimension=1))
    ref3 = jnp.concatenate([x1, x4], axis=1)
    assert out3.dtype == ref3.dtype
    assert np.array_equal(np.asarray(out3), np.asarray(ref3)), \
        "Pallas concat (mixed dtype) mismatch vs jnp.concatenate"

    print("KERNEL_OK")
</pallas_src>

<mosaic_0001>
module attributes {stable_mosaic.version = 11 : i64} {
  func.func @kernel(%arg0: i32, %arg1: memref<2x1024xf32, #tpu.memory_space<vmem>>, %arg2: memref<2x1024xf32, #tpu.memory_space<vmem>>, %arg3: memref<2x2048xf32, #tpu.memory_space<vmem>>, %arg4: memref<2x4096xf32, #tpu.memory_space<vmem>>) attributes {dimension_semantics = [#tpu.dimension_semantics<parallel>], iteration_bounds = array<i64: 1>, scalar_prefetch = 0 : i64, scratch_operands = 0 : i64, tpu.core_type = #tpu.core_type<tc>, window_params = [{transform_indices = @transform_0, window_bounds = array<i64: 2, 1024>}, {transform_indices = @transform_1, window_bounds = array<i64: 2, 1024>}, {transform_indices = @transform_2, window_bounds = array<i64: 2, 2048>}, {transform_indices = @transform_3, window_bounds = array<i64: 2, 4096>}]} {
    %c0 = arith.constant 0 : index
    %c0_0 = arith.constant 0 : index
    %0 = vector.load %arg1[%c0, %c0_0] : memref<2x1024xf32, #tpu.memory_space<vmem>>, vector<2x1024xf32>
    %c0_1 = arith.constant 0 : index
    %c0_2 = arith.constant 0 : index
    %1 = vector.load %arg4[%c0_1, %c0_2] : memref<2x4096xf32, #tpu.memory_space<vmem>>, vector<2x1024xf32>
    tpu.vector_store %arg4[%c0_1, %c0_2], %0 {strides = array<i32>} : memref<2x4096xf32, #tpu.memory_space<vmem>>, vector<2x1024xf32>,
    %c0_3 = arith.constant 0 : index
    %c0_4 = arith.constant 0 : index
    %2 = vector.load %arg2[%c0_3, %c0_4] : memref<2x1024xf32, #tpu.memory_space<vmem>>, vector<2x1024xf32>
    %c0_5 = arith.constant 0 : index
    %c1024 = arith.constant 1024 : index
    %3 = vector.load %arg4[%c0_5, %c1024] : memref<2x4096xf32, #tpu.memory_space<vmem>>, vector<2x1024xf32>
    tpu.vector_store %arg4[%c0_5, %c1024], %2 {strides = array<i32>} : memref<2x4096xf32, #tpu.memory_space<vmem>>, vector<2x1024xf32>,
    %c0_6 = arith.constant 0 : index
    %c0_7 = arith.constant 0 : index
    %4 = vector.load %arg3[%c0_6, %c0_7] : memref<2x2048xf32, #tpu.memory_space<vmem>>, vector<2x2048xf32>
    %c0_8 = arith.constant 0 : index
    %c2048 = arith.constant 2048 : index
    %5 = vector.load %arg4[%c0_8, %c2048] : memref<2x4096xf32, #tpu.memory_space<vmem>>, vector<2x2048xf32>
    tpu.vector_store %arg4[%c0_8, %c2048], %4 {strides = array<i32>} : memref<2x4096xf32, #tpu.memory_space<vmem>>, vector<2x2048xf32>,
    return
  }
  func.func @transform_0(%arg0: i32) -> (i32, i32) {
    %c0_i32 = arith.constant 0 : i32
    %c0_i32_0 = arith.constant 0 : i32
    return %arg0, %c0_i32 : i32, i32
  }
  func.func @transform_1(%arg0: i32) -> (i32, i32) {
    %c0_i32 = arith.constant 0 : i32
    %c0_i32_0 = arith.constant 0 : i32
    return %arg0, %c0_i32 : i32, i32
  }
  func.func @transform_2(%arg0: i32) -> (i32, i32) {
    %c0_i32 = arith.constant 0 : i32
    %c0_i32_0 = arith.constant 0 : i32
    return %arg0, %c0_i32 : i32, i32
  }
  func.func @transform_3(%arg0: i32) -> (i32, i32) {
    %c0_i32 = arith.constant 0 : i32
    %c0_i32_0 = arith.constant 0 : i32
    return %arg0, %c0_i32 : i32, i32
  }
}

</mosaic_0001>

<llo_original>
// kernel: tpu_custom_call.1
$region0: #{tpu_custom_call.1}
  #allocation0 [shape = 'u32[]', space=smem, size = 0x4, offset = 0x4, fixed_abs, tag = 'smem constant byte address 0x4 - core index']
  #allocation1 [shape = 'u32[144,128]{1,0:T(1,128)}', space=vmem, size = 0x12000, scoped, tag = 'internal scratch']
  %s0 = inlined_call_operand.hbm [shape: f32[2,1024], index: 0, kind: input, shape index: {}]
  %s1 = inlined_call_operand.hbm [shape: f32[2,1024], index: 1, kind: input, shape index: {}]
  %s2 = inlined_call_operand.hbm [shape: f32[2,2048], index: 2, kind: input, shape index: {}]
  %s3 = inlined_call_operand.hbm [shape: f32[2,4096], index: 3, kind: output, shape index: {}]
  %s4 = sld [smem:[#allocation0]]
  $region34: #{tpu_custom_call.1} parent=0
    _
  %s6 = ssub.s32 1, %s4
  %s7 = scalar_select 0, %s6, %s4
  $region1: #{tpu_custom_call.1} parent=0
    #allocation2 [shape = 'u8[8192]{0}', space=vmem, size = 0x2000, scoped, tag = 'input window, operand 0, single buffered']
    #allocation3 [shape = 's32[1]{0}', space=sflag, size = 0x4, scoped, tag = 'scoped memory for tpu_custom_call.1']
    #allocation4 [shape = 's32[1]{0}', space=sflag, size = 0x4, scoped, tag = 'scoped memory for tpu_custom_call.1']
    #allocation5 [shape = 'u8[8192]{0}', space=vmem, size = 0x2000, scoped, tag = 'input window, operand 1, single buffered']
    #allocation6 [shape = 's32[1]{0}', space=sflag, size = 0x4, scoped, tag = 'scoped memory for tpu_custom_call.1']
    #allocation7 [shape = 'u8[16384]{0}', space=vmem, size = 0x4000, scoped, tag = 'input window, operand 2, single buffered']
    #allocation8 [shape = 'u8[32768]{0}', space=vmem, size = 0x8000, scoped, tag = 'output window, operand 0, single buffered']
    %8 = vsyncpa [#allocation3], 0
    %9 = vsyncpa [#allocation6], 0
    %10 = vsyncpa [#allocation4], 0
    // Predicated region
    $region2: #{tpu_custom_call.1} parent=1 // pred_check
      _
    $region3: #{tpu_custom_call.1} parent=1 // pred_check_branch
      %12 = sbr.rel (0) target = $region5
    $region4: #{tpu_custom_call.1} parent=1 // pred_region
      %s14 = ssub.s32 256, 256
      %15 = vsyncadd [#allocation3], %s14
      %s17 = sshll.u32 [#allocation2], 4
      %s18 = int_to_ptr.vmem [resolvable:$true] %s17
      %20 = dma.hbm_to_vmem [thread:$0]  %s0, 256, %s18, [#allocation3]
    $region5: #{tpu_custom_call.1} parent=1 // pred_fallthru
      _
    // Predicated region
    $region6: #{tpu_custom_call.1} parent=1 // pred_check
      _
    $region7: #{tpu_custom_call.1} parent=1 // pred_check_branch
      %22 = sbr.rel (0) target = $region9
    $region8: #{tpu_custom_call.1} parent=1 // pred_region
      %s24 = ssub.s32 256, 256
      %25 = vsyncadd [#allocation6], %s24
      %s27 = sshll.u32 [#allocation5], 4
      %s28 = int_to_ptr.vmem [resolvable:$true] %s27
      %30 = dma.hbm_to_vmem [thread:$0]  %s1, 256, %s28, [#allocation6]
    $region9: #{tpu_custom_call.1} parent=1 // pred_fallthru
      _
    // Predicated region
    $region10: #{tpu_custom_call.1} parent=1 // pred_check
      _
    $region11: #{tpu_custom_call.1} parent=1 // pred_check_branch
      %32 = sbr.rel (0) target = $region13
    $region12: #{tpu_custom_call.1} parent=1 // pred_region
      %s34 = ssub.s32 512, 512
      %35 = vsyncadd [#allocation6], %s34
      %s37 = sshll.u32 [#allocation7], 4
      %s38 = int_to_ptr.vmem [resolvable:$true] %s37
      %40 = dma.hbm_to_vmem [thread:$0]  %s2, 512, %s38, [#allocation6]
    $region13: #{tpu_custom_call.1} parent=1 // pred_fallthru
      _
    // Predicated region
    $region14: #{tpu_custom_call.1} parent=1 // pred_check
      _
    $region15: #{tpu_custom_call.1} parent=1 // pred_check_branch
      %42 = sbr.rel (0) target = $region17
    $region16: #{tpu_custom_call.1} parent=1 // pred_region
      %43 = dma.done [#allocation3], 256
    $region17: #{tpu_custom_call.1} parent=1 // pred_fallthru
      _
    // Predicated region
    $region18: #{tpu_custom_call.1} parent=1 // pred_check
      _
    $region19: #{tpu_custom_call.1} parent=1 // pred_check_branch
      %45 = sbr.rel (0) target = $region21
    $region20: #{tpu_custom_call.1} parent=1 // pred_region
      %46 = dma.done [#allocation6], 256
    $region21: #{tpu_custom_call.1} parent=1 // pred_fallthru
      _
    // Predicated region
    $region22: #{tpu_custom_call.1} parent=1 // pred_check
      _
    $region23: #{tpu_custom_call.1} parent=1 // pred_check_branch
      %48 = sbr.rel (0) target = $region25
    $region24: #{tpu_custom_call.1} parent=1 // pred_region
      %49 = dma.done [#allocation6], 512
    $region25: #{tpu_custom_call.1} parent=1 // pred_fallthru
      _
    %v50 = vld [vmem:[#allocation2] sm:$0xff]
    %v51 = vld [vmem:[#allocation2 + $0x8] sm:$0xff]
    %52 = vst [vmem:[#allocation8] sm:$0xff] %v50
    %53 = vst [vmem:[#allocation8 + $0x8] sm:$0xff] %v51
    %v54 = vld [vmem:[#allocation5] sm:$0xff]
    %v55 = vld [vmem:[#allocation5 + $0x8] sm:$0xff]
    %56 = vst [vmem:[#allocation8 + $0x10] sm:$0xff] %v54
    %57 = vst [vmem:[#allocation8 + $0x18] sm:$0xff] %v55
    %v58 = vld [vmem:[#allocation7] sm:$0xff]
    %v59 = vld [vmem:[#allocation7 + $0x8] sm:$0xff]
    %v60 = vld [vmem:[#allocation7 + $0x10] sm:$0xff]
    %v61 = vld [vmem:[#allocation7 + $0x18] sm:$0xff]
    %62 = vst [vmem:[#allocation8 + $0x20] sm:$0xff] %v58
    %63 = vst [vmem:[#allocation8 + $0x28] sm:$0xff] %v59
    %64 = vst [vmem:[#allocation8 + $0x30] sm:$0xff] %v60
    %65 = vst [vmem:[#allocation8 + $0x38] sm:$0xff] %v61
    // Predicated region
    $region26: #{tpu_custom_call.1} parent=1 // pred_check
      _
    $region27: #{tpu_custom_call.1} parent=1 // pred_check_branch
      %67 = sbr.rel (0) target = $region29
    $region28: #{tpu_custom_call.1} parent=1 // pred_region
      %s69 = ssub.s32 1024, 1024
      %70 = vsyncadd [#allocation4], %s69
      %s72 = sshll.u32 [#allocation8], 4
      %s73 = int_to_ptr.vmem [resolvable:$true] %s72
      %75 = dma.vmem_to_hbm [thread:$0]  %s73, 1024, %s3, [#allocation4]
    $region29: #{tpu_custom_call.1} parent=1 // pred_fallthru
      _
    // Predicated region
    $region30: #{tpu_custom_call.1} parent=1 // pred_check
      _
    $region31: #{tpu_custom_call.1} parent=1 // pred_check_branch
      %77 = sbr.rel (0) target = $region33
    $region32: #{tpu_custom_call.1} parent=1 // pred_region
      %78 = dma.done [#allocation4], 1024
    $region33: #{tpu_custom_call.1} parent=1 // pred_fallthru
      _
    %79 = vsyncpa [#allocation3], 1
    %80 = vsyncpa [#allocation6], 1
    %81 = vsyncpa [#allocation4], 1

</llo_original>
